<compile_context>
chip_gen: v7x
topology: tpu7x:2x2x1
jax: 0.10.0
libtpu: 0.0.40
codegen_flags: <defaults>
</compile_context>

<pallas_src>
import functools

import numpy as np
import jax
import jax.numpy as jnp
from jax.experimental import pallas as pl
from jax.experimental.pallas import tpu as pltpu


# ------------------------------ Pallas kernel -------------------------------

def _addnorm_kernel(x_ref, y_ref, g_ref, b_ref, o_ref, *, eps, inv_d):
    # x_ref, y_ref, o_ref: (bm, D) tile; g_ref, b_ref: (1, D) resident params.
    y = y_ref[...].astype(jnp.float32)
    x = x_ref[...].astype(jnp.float32)

    # Two independent row reductions (overlap on the XLU), no centered temp.
    s1 = jnp.sum(y, axis=-1, keepdims=True)            # (bm, 1)
    s2 = jnp.sum(y * y, axis=-1, keepdims=True)        # (bm, 1)
    mean = s1 * inv_d
    var = jnp.maximum(s2 * inv_d - mean * mean, 0.0)    # clamp cancellation
    rstd = jax.lax.rsqrt(var + eps)                     # (bm, 1)
    shift = mean * rstd                                 # (bm, 1)

    # (y - mean) * rstd * gamma + beta + x, with the subtraction folded into
    # per-row scalars; one mul / sub / mul / add pass over the big tile.
    out = (y * rstd - shift) * g_ref[...] + (x + b_ref[...])
    o_ref[...] = out.astype(o_ref.dtype)


def _pick_block_rows(M, D, itemsize):
    """Row tile: multiple of 8 sublanes, ~<=4 MiB per input tile, capped at
    2048 rows, and small enough that the parallel grid has >=4 steps whenever
    M permits (so both v7x TensorCores get >=2 pipelined steps)."""
    target_bytes = 4 * 1024 * 1024
    bm = (target_bytes // max(D * itemsize, 1)) // 8 * 8
    bm = max(8, min(2048, bm))

    quarter = (M // 4) // 8 * 8          # >= 4 grid steps when possible
    if quarter >= 8:
        bm = min(bm, quarter)

    bm = min(bm, max(8, -(-M // 8) * 8))  # never exceed the (8-rounded) rows
    return bm


def addnorm(x, y, gamma, beta, *, eps=1e-5):
    """AddNorm forward: LayerNorm(y) * gamma + beta + x  (dropout = identity)."""
    assert x.shape == y.shape
    lead = x.shape[:-1]
    D = x.shape[-1]
    M = int(np.prod(lead)) if lead else 1

    if D < 128:
        # Narrow feature axes (< one lane group) waste >=3/4 of every vreg and
        # force masked partial stores -- plain XLA is the better layout here.
        return addnorm_reference(x, y, gamma, beta, eps)

    x2 = x.reshape(M, D)
    y2 = y.reshape(M, D)
    g2 = gamma.reshape(1, D).astype(jnp.float32)
    b2 = beta.reshape(1, D).astype(jnp.float32)

    itemsize = int(jnp.dtype(x.dtype).itemsize)
    bm = _pick_block_rows(M, D, itemsize)
    grid = (pl.cdiv(M, bm),)   # partial final block is masked by Pallas

    cost = pl.CostEstimate(
        flops=8 * M * D,
        transcendentals=M,
        bytes_accessed=3 * M * D * itemsize + 2 * D * 4,
    )

    out = pl.pallas_call(
        functools.partial(_addnorm_kernel, eps=eps, inv_d=1.0 / D),
        out_shape=jax.ShapeDtypeStruct((M, D), x.dtype),
        grid=grid,
        in_specs=[
            pl.BlockSpec((bm, D), lambda i: (i, 0)),   # x tile
            pl.BlockSpec((bm, D), lambda i: (i, 0)),   # y tile
            pl.BlockSpec((1, D), lambda i: (0, 0)),    # gamma (resident)
            pl.BlockSpec((1, D), lambda i: (0, 0)),    # beta  (resident)
        ],
        out_specs=pl.BlockSpec((bm, D), lambda i: (i, 0)),
        compiler_params=pltpu.CompilerParams(
            dimension_semantics=("parallel",),         # megacore-shardable
            vmem_limit_bytes=48 * 1024 * 1024,         # fits v5e/v6e/v7x
        ),
        cost_estimate=cost,
    )(x2, y2, g2, b2)

    return out.reshape(lead + (D,))


# ---------------------------- pure-JAX reference ----------------------------

def addnorm_reference(x, y, gamma, beta, eps=1e-5):
    yf = y.astype(jnp.float32)
    mu = jnp.mean(yf, axis=-1, keepdims=True)
    var = jnp.mean((yf - mu) ** 2, axis=-1, keepdims=True)
    yn = (yf - mu) / jnp.sqrt(var + eps)
    out = yn * gamma.astype(jnp.float32) + beta.astype(jnp.float32) \
        + x.astype(jnp.float32)
    return out.astype(x.dtype)


# ----------------------------------- main -----------------------------------

if __name__ == "__main__":
    key = jax.random.PRNGKey(0)

    def params(k, D):
        k3, k4 = jax.random.split(k)
        gamma = 1.0 + 0.1 * jax.random.normal(k3, (D,), jnp.float32)
        beta = 0.1 * jax.random.normal(k4, (D,), jnp.float32)
        return gamma, beta

    # (batch, seq, d_model):
    #   (2, 8, 128)   small, single-block Pallas path
    #   (2, 200, 256) multi-step grid with a masked partial final block
    #   (2, 8, 32)    tiny d_model -> XLA fallback path (D < 128 guard)
    for (B, N, D) in [(2, 8, 128), (2, 200, 256), (2, 8, 32)]:
        key, k1, k2, kp = jax.random.split(key, 4)
        x = jax.random.normal(k1, (B, N, D), jnp.float32)
        y = jax.random.normal(k2, (B, N, D), jnp.float32)
        gamma, beta = params(kp, D)

        out = jax.block_until_ready(addnorm(x, y, gamma, beta))
        assert out.shape == (B, N, D)
        ref = addnorm_reference(x, y, gamma, beta)
        np.testing.assert_allclose(np.asarray(out), np.asarray(ref),
                                   rtol=2e-4, atol=2e-4)

    # bf16 activations: exercises dtype-aware tile sizing and the f32 math path.
    key, k1, k2, kp = jax.random.split(key, 4)
    B, N, D = 2, 64, 128
    x = jax.random.normal(k1, (B, N, D), jnp.float32).astype(jnp.bfloat16)
    y = jax.random.normal(k2, (B, N, D), jnp.float32).astype(jnp.bfloat16)
    gamma, beta = params(kp, D)
    out = jax.block_until_ready(addnorm(x, y, gamma, beta))
    ref = addnorm_reference(x.astype(jnp.float32), y.astype(jnp.float32),
                            gamma, beta)
    np.testing.assert_allclose(np.asarray(out).astype(np.float32),
                               np.asarray(ref), rtol=2e-2, atol=2e-2)

    print("KERNEL_OK")
</pallas_src>

<mosaic_0001>
module attributes {stable_mosaic.version = 11 : i64} {
  func.func @_addnorm_kernel(%arg0: i32, %arg1: memref<16x128xf32, #tpu.memory_space<vmem>>, %arg2: memref<16x128xf32, #tpu.memory_space<vmem>>, %arg3: memref<1x128xf32, #tpu.memory_space<vmem>>, %arg4: memref<1x128xf32, #tpu.memory_space<vmem>>, %arg5: memref<16x128xf32, #tpu.memory_space<vmem>>) attributes {dimension_semantics = [#tpu.dimension_semantics<parallel>], iteration_bounds = array<i64: 1>, scalar_prefetch = 0 : i64, scratch_operands = 0 : i64, tpu.core_type = #tpu.core_type<tc>, window_params = [{transform_indices = @transform_0, window_bounds = array<i64: 16, 128>}, {transform_indices = @transform_1, window_bounds = array<i64: 16, 128>}, {pipeline_mode = #tpu.pipeline_mode<synchronous>, transform_indices = @transform_2, window_bounds = array<i64: 1, 128>}, {pipeline_mode = #tpu.pipeline_mode<synchronous>, transform_indices = @transform_3, window_bounds = array<i64: 1, 128>}, {transform_indices = @transform_4, window_bounds = array<i64: 16, 128>}]} {
    %c0 = arith.constant 0 : index
    %c0_0 = arith.constant 0 : index
    %0 = vector.load %arg2[%c0, %c0_0] : memref<16x128xf32, #tpu.memory_space<vmem>>, vector<16x128xf32>
    %c0_1 = arith.constant 0 : index
    %c0_2 = arith.constant 0 : index
    %1 = vector.load %arg1[%c0_1, %c0_2] : memref<16x128xf32, #tpu.memory_space<vmem>>, vector<16x128xf32>
    %cst = arith.constant dense<0.000000e+00> : vector<16xf32>
    %2 = vector.multi_reduction <add>, %0, %cst [1] : vector<16x128xf32> to vector<16xf32>
    %3 = vector.shape_cast %2 : vector<16xf32> to vector<16x1xf32>
    %4 = arith.mulf %0, %0 : vector<16x128xf32>
    %cst_3 = arith.constant dense<0.000000e+00> : vector<16xf32>
    %5 = vector.multi_reduction <add>, %4, %cst_3 [1] : vector<16x128xf32> to vector<16xf32>
    %6 = vector.shape_cast %5 : vector<16xf32> to vector<16x1xf32>
    %cst_4 = arith.constant 7.812500e-03 : f32
    %7 = vector.broadcast %cst_4 : f32 to vector<16x1xf32>
    %8 = arith.mulf %3, %7 : vector<16x1xf32>
    %cst_5 = arith.constant 7.812500e-03 : f32
    %9 = vector.broadcast %cst_5 : f32 to vector<16x1xf32>
    %10 = arith.mulf %6, %9 : vector<16x1xf32>
    %11 = arith.mulf %8, %8 : vector<16x1xf32>
    %12 = arith.subf %10, %11 : vector<16x1xf32>
    %cst_6 = arith.constant 0.000000e+00 : f32
    %13 = vector.broadcast %cst_6 : f32 to vector<16x1xf32>
    %14 = arith.maximumf %12, %13 : vector<16x1xf32>
    %cst_7 = arith.constant 9.99999974E-6 : f32
    %15 = vector.broadcast %cst_7 : f32 to vector<16x1xf32>
    %16 = arith.addf %14, %15 : vector<16x1xf32>
    %17 = math.rsqrt %16 : vector<16x1xf32>
    %18 = arith.mulf %8, %17 : vector<16x1xf32>
    %19 = vector.broadcast %17 : vector<16x1xf32> to vector<16x128xf32>
    %20 = arith.mulf %0, %19 : vector<16x128xf32>
    %21 = vector.broadcast %18 : vector<16x1xf32> to vector<16x128xf32>
    %22 = arith.subf %20, %21 : vector<16x128xf32>
    %c0_8 = arith.constant 0 : index
    %c0_9 = arith.constant 0 : index
    %23 = vector.load %arg3[%c0_8, %c0_9] : memref<1x128xf32, #tpu.memory_space<vmem>>, vector<1x128xf32>
    %24 = vector.broadcast %23 : vector<1x128xf32> to vector<16x128xf32>
    %25 = arith.mulf %22, %24 : vector<16x128xf32>
    %c0_10 = arith.constant 0 : index
    %c0_11 = arith.constant 0 : index
    %26 = vector.load %arg4[%c0_10, %c0_11] : memref<1x128xf32, #tpu.memory_space<vmem>>, vector<1x128xf32>
    %27 = vector.broadcast %26 : vector<1x128xf32> to vector<16x128xf32>
    %28 = arith.addf %1, %27 : vector<16x128xf32>
    %29 = arith.addf %25, %28 : vector<16x128xf32>
    %c0_12 = arith.constant 0 : index
    %c0_13 = arith.constant 0 : index
    %30 = vector.load %arg5[%c0_12, %c0_13] : memref<16x128xf32, #tpu.memory_space<vmem>>, vector<16x128xf32>
    tpu.vector_store %arg5[%c0_12, %c0_13], %29 {strides = array<i32>} : memref<16x128xf32, #tpu.memory_space<vmem>>, vector<16x128xf32>,
    return
  }
  func.func @transform_0(%arg0: i32) -> (i32, i32) {
    %c0_i32 = arith.constant 0 : i32
    %c0_i32_0 = arith.constant 0 : i32
    return %arg0, %c0_i32 : i32, i32
  }
  func.func @transform_1(%arg0: i32) -> (i32, i32) {
    %c0_i32 = arith.constant 0 : i32
    %c0_i32_0 = arith.constant 0 : i32
    return %arg0, %c0_i32 : i32, i32
  }
  func.func @transform_2(%arg0: i32) -> (i32, i32) {
    %c0_i32 = arith.constant 0 : i32
    %c0_i32_0 = arith.constant 0 : i32
    %c0_i32_1 = arith.constant 0 : i32
    return %c0_i32, %c0_i32_0 : i32, i32
  }
  func.func @transform_3(%arg0: i32) -> (i32, i32) {
    %c0_i32 = arith.constant 0 : i32
    %c0_i32_0 = arith.constant 0 : i32
    %c0_i32_1 = arith.constant 0 : i32
    return %c0_i32, %c0_i32_0 : i32, i32
  }
  func.func @transform_4(%arg0: i32) -> (i32, i32) {
    %c0_i32 = arith.constant 0 : i32
    %c0_i32_0 = arith.constant 0 : i32
    return %arg0, %c0_i32 : i32, i32
  }
}

</mosaic_0001>

<llo_original>
// kernel: tpu_custom_call.1
$region0: #{tpu_custom_call.1}
  #allocation0 [shape = 'u32[]', space=smem, size = 0x4, offset = 0x4, fixed_abs, tag = 'smem constant byte address 0x4 - core index']
  #allocation1 [shape = 'u32[144,128]{1,0:T(1,128)}', space=vmem, size = 0x12000, scoped, tag = 'internal scratch']
  %s0 = inlined_call_operand.hbm [shape: f32[16,128], index: 0, kind: input, shape index: {}]
  %s1 = inlined_call_operand.hbm [shape: f32[16,128], index: 1, kind: input, shape index: {}]
  %s2 = inlined_call_operand.vmem [shape: f32[1,128], index: 2, kind: input, shape index: {}]
  %s3 = inlined_call_operand.vmem [shape: f32[1,128], index: 3, kind: input, shape index: {}]
  %s4 = inlined_call_operand.hbm [shape: f32[16,128], index: 4, kind: output, shape index: {}]
  %s5 = sld [smem:[#allocation0]]
  $region34: #{tpu_custom_call.1} parent=0
    _
  %s7 = ssub.s32 1, %s5
  %s8 = scalar_select 0, %s7, %s5
  $region1: #{tpu_custom_call.1} parent=0
    #allocation2 [shape = 'u8[8192]{0}', space=vmem, size = 0x2000, scoped, tag = 'input window, operand 0, single buffered']
    #allocation3 [shape = 's32[1]{0}', space=sflag, size = 0x4, scoped, tag = 'scoped memory for tpu_custom_call.1']
    #allocation4 [shape = 's32[1]{0}', space=sflag, size = 0x4, scoped, tag = 'scoped memory for tpu_custom_call.1']
    #allocation5 [shape = 'u8[8192]{0}', space=vmem, size = 0x2000, scoped, tag = 'input window, operand 1, single buffered']
    #allocation6 [shape = 's32[1]{0}', space=sflag, size = 0x4, scoped, tag = 'scoped memory for tpu_custom_call.1']
    #allocation7 [shape = 'u8[8192]{0}', space=vmem, size = 0x2000, scoped, tag = 'output window, operand 0, single buffered']
    %9 = vsyncpa [#allocation3], 0
    %10 = vsyncpa [#allocation6], 0
    %11 = vsyncpa [#allocation4], 0
    // Predicated region
    $region2: #{tpu_custom_call.1} parent=1 // pred_check
      _
    $region3: #{tpu_custom_call.1} parent=1 // pred_check_branch
      %13 = sbr.rel (0) target = $region5
    $region4: #{tpu_custom_call.1} parent=1 // pred_region
      %s15 = ssub.s32 256, 256
      %16 = vsyncadd [#allocation3], %s15
      %s17 = sshll.u32 [#allocation2], 4
      %s18 = int_to_ptr.vmem [resolvable:$true] %s17
      %23 = dma.hbm_to_vmem [thread:$0]  %s0, 256, %s18, [#allocation3], 128, 128, 8
    $region5: #{tpu_custom_call.1} parent=1 // pred_fallthru
      _
    // Predicated region
    $region6: #{tpu_custom_call.1} parent=1 // pred_check
      _
    $region7: #{tpu_custom_call.1} parent=1 // pred_check_branch
      %25 = sbr.rel (0) target = $region9
    $region8: #{tpu_custom_call.1} parent=1 // pred_region
      %s27 = ssub.s32 256, 256
      %28 = vsyncadd [#allocation6], %s27
      %s29 = sshll.u32 [#allocation5], 4
      %s30 = int_to_ptr.vmem [resolvable:$true] %s29
      %35 = dma.hbm_to_vmem [thread:$0]  %s1, 256, %s30, [#allocation6], 128, 128, 8
    $region9: #{tpu_custom_call.1} parent=1 // pred_fallthru
      _
    // Predicated region
    $region10: #{tpu_custom_call.1} parent=1 // pred_check
      _
    $region11: #{tpu_custom_call.1} parent=1 // pred_check_branch
      %37 = sbr.rel (0) target = $region13
    $region12: #{tpu_custom_call.1} parent=1 // pred_region
      _
    $region13: #{tpu_custom_call.1} parent=1 // pred_fallthru
      _
    // Predicated region
    $region14: #{tpu_custom_call.1} parent=1 // pred_check
      _
    $region15: #{tpu_custom_call.1} parent=1 // pred_check_branch
      %39 = sbr.rel (0) target = $region17
    $region16: #{tpu_custom_call.1} parent=1 // pred_region
      _
    $region17: #{tpu_custom_call.1} parent=1 // pred_fallthru
      _
    // Predicated region
    $region18: #{tpu_custom_call.1} parent=1 // pred_check
      _
    $region19: #{tpu_custom_call.1} parent=1 // pred_check_branch
      %41 = sbr.rel (0) target = $region21
    $region20: #{tpu_custom_call.1} parent=1 // pred_region
      %42 = dma.done [#allocation3], 256
    $region21: #{tpu_custom_call.1} parent=1 // pred_fallthru
      _
    // Predicated region
    $region22: #{tpu_custom_call.1} parent=1 // pred_check
      _
    $region23: #{tpu_custom_call.1} parent=1 // pred_check_branch
      %44 = sbr.rel (0) target = $region25
    $region24: #{tpu_custom_call.1} parent=1 // pred_region
      %45 = dma.done [#allocation6], 256
    $region25: #{tpu_custom_call.1} parent=1 // pred_fallthru
      _
    %v46 = vld [vmem:[#allocation5] sm:$0xff]
    %v47 = vld [vmem:[#allocation5 + $0x8] sm:$0xff]
    %v48 = vld [vmem:[#allocation2] sm:$0xff]
    %v49 = vld [vmem:[#allocation2 + $0x8] sm:$0xff]
    %50 = vadd.xlane.f32.xlu0 %v46
    %v51 = vpop.xlane.xlu0 %50
    %52 = vadd.xlane.f32.xlu0 %v47
    %v53 = vpop.xlane.xlu0 %52
    %v54 = vmul.f32 %v46, %v46
    %v55 = vmul.f32 %v47, %v47
    %56 = vadd.xlane.f32.xlu0 %v54
    %v57 = vpop.xlane.xlu0 %56
    %58 = vadd.xlane.f32.xlu0 %v55
    %v59 = vpop.xlane.xlu0 %58
    %v60 = vmul.f32 %v51, 0.0078125
    %v61 = vmul.f32 %v53, 0.0078125
    %v62 = vmul.f32 %v57, 0.0078125
    %v63 = vmul.f32 %v59, 0.0078125
    %v64 = vmul.f32 %v60, %v60
    %v65 = vmul.f32 %v61, %v61
    %v66 = vsub.f32 %v62, %v64
    %v67 = vsub.f32 %v63, %v65
    %v68 = vmax.f32 %v66, 0.0
    %v69 = vmax.f32 %v67, 0.0
    %v70 = vadd.f32 %v68, 1e-05
    %v71 = vadd.f32 %v69, 1e-05
    %v72 = vrsqrt.pop %v70
    %v73 = vrsqrt.pop %v71
    %v74 = vmul.f32 %v60, %v72
    %v75 = vmul.f32 %v61, %v73
    %v76 = vmul.f32 %v46, %v72
    %v77 = vmul.f32 %v47, %v73
    %v78 = vsub.f32 %v76, %v74
    %v79 = vsub.f32 %v77, %v75
    %v80 = vld [vmem:[%s2] sm:$0x1]
    %v82 = vlaneseq
    %v83 = vshrl.u32 %v82, 7
    %v84 = vsub.s32 0, %v83
    %v85 = vrot.slane %v80, %v84
    %v87 = vmul.f32 %v78, %v85
    %v88 = vmul.f32 %v79, %v85
    %v89 = vld [vmem:[%s3] sm:$0x1]
    %v91 = vlaneseq
    %v92 = vshrl.u32 %v91, 7
    %v93 = vsub.s32 0, %v92
    %v94 = vrot.slane %v89, %v93
    %v96 = vadd.f32 %v48, %v94
    %v97 = vadd.f32 %v49, %v94
    %v98 = vadd.f32 %v87, %v96
    %v99 = vadd.f32 %v88, %v97
    %100 = vst [vmem:[#allocation7] sm:$0xff] %v98
    %101 = vst [vmem:[#allocation7 + $0x8] sm:$0xff] %v99
    // Predicated region
    $region26: #{tpu_custom_call.1} parent=1 // pred_check
      _
    $region27: #{tpu_custom_call.1} parent=1 // pred_check_branch
      %103 = sbr.rel (0) target = $region29
    $region28: #{tpu_custom_call.1} parent=1 // pred_region
      %s105 = ssub.s32 256, 256
      %106 = vsyncadd [#allocation4], %s105
      %s107 = sshll.u32 [#allocation7], 4
      %s108 = int_to_ptr.vmem [resolvable:$true] %s107
      %113 = dma.vmem_to_hbm [thread:$0]  %s108, 256, %s4, [#allocation4], 128, 128, 8
    $region29: #{tpu_custom_call.1} parent=1 // pred_fallthru
      _
    // Predicated region
    $region30: #{tpu_custom_call.1} parent=1 // pred_check
      _
    $region31: #{tpu_custom_call.1} parent=1 // pred_check_branch
      %115 = sbr.rel (0) target = $region33
    $region32: #{tpu_custom_call.1} parent=1 // pred_region
      %116 = dma.done [#allocation4], 256
    $region33: #{tpu_custom_call.1} parent=1 // pred_fallthru
      _
    %117 = vsyncpa [#allocation3], 1
    %118 = vsyncpa [#allocation6], 1
    %119 = vsyncpa [#allocation4], 1

</llo_original>
